<compile_context>
chip_gen: v6e
topology: v6e:2x2x1
jax: 0.10.0
libtpu: 0.0.40
codegen_flags: <defaults>
</compile_context>

<pallas_src>
import functools

import jax
import jax.numpy as jnp
from jax import lax
from jax.experimental import pallas as pl
from jax.experimental.pallas import tpu as pltpu

_ACC_ROWS = 24  # 3 partial quantities x one 8-row sublane group each.


def _cdiv(a, b):
    return -(-a // b)


# --------------------------------------------------------------------------
# Kernel body (shared by the flat and native paths).
# --------------------------------------------------------------------------
def _dice_kernel(*refs, has_weights, rows_valid, row_tile, blocks_per_split,
                 split_rows, needs_mask):
    """Accumulate per-lane partials of p*g*m, p*m, g*m into a resident block.

    Grid is (outer, inner); the output block index depends only on `outer`, so
    the (24, TC) output block stays resident across the inner ("arbitrary")
    axis and acts as an accumulator: rows 0-7 = intersection, 8-15 = sum(p*m),
    16-23 = sum(g*m).
    """
    if has_weights:
        pred_ref, gt_ref, mask_ref, w_ref, out_ref = refs
    else:
        pred_ref, gt_ref, mask_ref, out_ref = refs

    i = pl.program_id(0)
    j = pl.program_id(1)

    @pl.when(j == 0)
    def _init():
        out_ref[...] = jnp.zeros_like(out_ref)

    p = pred_ref[...].astype(jnp.float32)
    g = gt_ref[...].astype(jnp.float32)
    m = mask_ref[...].astype(jnp.float32)
    if has_weights:
        m = m * w_ref[...].astype(jnp.float32)

    tr, tc = p.shape

    def _gsum(x):
        # Reduce (tr, tc) -> (rows, tc). When tr % 8 == 0 this is a sublane-
        # group sum (pure vreg adds, no XLU cross-sublane reduce, 8-aligned
        # store); the ragged fallback collapses to a single row.
        if tr % 8 == 0:
            if tr == 8:
                return x, 8
            return jnp.sum(x.reshape(tr // 8, 8, tc), axis=0), 8
        return jnp.sum(x, axis=0, keepdims=True), 1

    def _accumulate(p, g, m):
        pm = p * m
        gm = g * m
        inter, r = _gsum(pm * g)
        out_ref[0:r, :] += inter
        spm, r = _gsum(pm)
        out_ref[8:8 + r, :] += spm
        sgm, r = _gsum(gm)
        out_ref[16:16 + r, :] += sgm

    if not needs_mask:
        _accumulate(p, g, m)
    else:
        vb = i * blocks_per_split + j if split_rows else j
        row0 = vb * row_tile
        is_full = row0 + row_tile <= rows_valid

        @pl.when(is_full)  # hot path: interior blocks skip all masking work
        def _full():
            _accumulate(p, g, m)

        @pl.when(jnp.logical_not(is_full))
        def _partial():
            # Edge / duplicate block: zero out-of-range rows with a select
            # BEFORE any multiply (out-of-range data may be NaN/Inf).
            rows = row0 + lax.broadcasted_iota(jnp.int32, p.shape, 0)
            valid = rows < rows_valid
            zero = jnp.zeros((), jnp.float32)
            _accumulate(jnp.where(valid, p, zero),
                        jnp.where(valid, g, zero),
                        jnp.where(valid, m, zero))


def _finalize(partials, eps):
    # Tiny JAX epilogue: cross-block / cross-sublane / cross-lane combine and
    # the scalar dice math.
    parts = partials.reshape(-1, 3, 8, partials.shape[-1])
    intersection = jnp.sum(parts[:, 0])
    union = jnp.sum(parts[:, 1]) + jnp.sum(parts[:, 2]) + eps
    return 1.0 - 2.0 * intersection / union


# --------------------------------------------------------------------------
# Chip-aware defaults.
# --------------------------------------------------------------------------
def _device_kind():
    try:
        return jax.devices()[0].device_kind.lower()
    except Exception:
        return ""


def _chip_defaults():
    """(row_tile, num_splits, vmem_limit_bytes) per TPU generation."""
    kind = _device_kind()
    if "v5 lite" in kind or "v5lite" in kind or "v5e" in kind:
        # 1 MiB blocks keep 4 streams x 2 buffers inside the 16 MiB default
        # scoped-VMEM budget on v5e.
        return 512, 1, None
    if "v6" in kind:
        return 1024, 1, 64 << 20          # 2 MiB blocks; 128 MiB physical VMEM
    if "v7" in kind or "tpu7" in kind or "7x" in kind:
        return 1024, 2, 48 << 20          # 2 TCs; stay well under 64 MiB VMEM
    if "v4" in kind or "v5p" in kind:
        return 1024, 2, 48 << 20          # megacore: split across both cores
    return 512, 1, None                   # conservative fallback


# --------------------------------------------------------------------------
# Flat lane-dense streaming path (free bitcast reshape, no copies).
# --------------------------------------------------------------------------
def _dice_flat(pred, gt, mask, weights, eps, lane, row_tile, num_splits,
               vmem_limit):
    inputs = [pred.reshape(-1, lane), gt.reshape(-1, lane),
              mask.reshape(-1, lane)]
    if weights is not None:
        inputs.append(weights.reshape(-1, lane))
    rows_total = inputs[0].shape[0]

    tr = min(row_tile, rows_total)
    if tr < rows_total:
        tr = max(8, (tr // 8) * 8)
    num_blocks = _cdiv(rows_total, tr)
    nsplit = max(1, min(num_splits, num_blocks))
    bps = _cdiv(num_blocks, nsplit)
    needs_mask = (rows_total % tr != 0) or (nsplit * bps != num_blocks)

    def in_map(i, j):
        # Clamp so duplicate tail iterations of the last split never address a
        # fully out-of-range block; the in-kernel mask uses the *unclamped*
        # virtual index and zeroes their contribution.
        return (jnp.minimum(i * bps + j, num_blocks - 1), 0)

    in_spec = pl.BlockSpec((tr, lane), in_map)
    out_spec = pl.BlockSpec((_ACC_ROWS, lane), lambda i, j: (i, 0))

    kernel = functools.partial(
        _dice_kernel, has_weights=weights is not None, rows_valid=rows_total,
        row_tile=tr, blocks_per_split=bps, split_rows=True,
        needs_mask=needs_mask)

    bytes_in = sum(x.size * x.dtype.itemsize for x in inputs)
    cost = pl.CostEstimate(flops=7 * rows_total * lane, transcendentals=0,
                           bytes_accessed=bytes_in + nsplit * _ACC_ROWS * lane * 4)

    partials = pl.pallas_call(
        kernel,
        out_shape=jax.ShapeDtypeStruct((nsplit * _ACC_ROWS, lane), jnp.float32),
        grid_spec=pltpu.PrefetchScalarGridSpec(
            num_scalar_prefetch=0,
            grid=(nsplit, bps),
            in_specs=[in_spec] * len(inputs),
            out_specs=out_spec),
        compiler_params=pltpu.CompilerParams(
            dimension_semantics=("parallel", "arbitrary"),
            vmem_limit_bytes=vmem_limit),
        cost_estimate=cost,
    )(*inputs)
    return _finalize(partials, eps)


# --------------------------------------------------------------------------
# Native-shape path: 4-D channel-0 via strided BlockSpec DMA, or any shape
# whose element count is not lane-divisible (no pad, no slice copies).
# --------------------------------------------------------------------------
def _dice_native(pred, gt, mask, weights, eps, four_d, row_tile, vmem_limit):
    if not four_d:
        def to3d(x):  # free reshapes: collapse/expand leading dims only
            if x.ndim >= 3:
                return x.reshape((-1,) + x.shape[-2:])
            if x.ndim == 2:
                return x.reshape((1,) + x.shape)
            return x.reshape((1, 1, -1))
        pred, gt, mask = to3d(pred), to3d(gt), to3d(mask)
        if weights is not None:
            weights = to3d(weights)
    B, H, W = mask.shape

    # Row block of the (H, W) plane sized to the same VMEM budget as the flat
    # path, measured on the lane-padded footprint.
    w_pad = _cdiv(W, 128) * 128
    th = min(H, max(8, (row_tile * 512) // w_pad))
    if th < H:
        th = max(8, (th // 8) * 8)
    n_h = _cdiv(H, th)
    needs_mask = (H % th) != 0

    if four_d:
        # Strided DMA reads only channel 0 of (B, C, H, W) — no HBM slice copy.
        pg_spec = pl.BlockSpec((pl.Squeezed(), pl.Squeezed(), th, W),
                               lambda b, h: (b, 0, h, 0))
    else:
        pg_spec = pl.BlockSpec((pl.Squeezed(), th, W), lambda b, h: (b, h, 0))
    m_spec = pl.BlockSpec((pl.Squeezed(), th, W), lambda b, h: (b, h, 0))

    inputs = [pred, gt, mask]
    in_specs = [pg_spec, pg_spec, m_spec]
    if weights is not None:
        inputs.append(weights)
        in_specs.append(m_spec)

    out_spec = pl.BlockSpec((_ACC_ROWS, W), lambda b, h: (b, 0))

    kernel = functools.partial(
        _dice_kernel, has_weights=weights is not None, rows_valid=H,
        row_tile=th, blocks_per_split=0, split_rows=False,
        needs_mask=needs_mask)

    n_used = B * H * W  # only channel 0 of 4-D pred/gt is ever read
    bytes_in = sum(n_used * x.dtype.itemsize for x in inputs)
    cost = pl.CostEstimate(flops=7 * n_used, transcendentals=0,
                           bytes_accessed=bytes_in + B * _ACC_ROWS * W * 4)

    # TODO(synk): when B == 1 on a 2-TensorCore chip the parallel batch axis
    # gives no core parallelism; an extra leading split of H would fix that.
    partials = pl.pallas_call(
        kernel,
        out_shape=jax.ShapeDtypeStruct((B * _ACC_ROWS, W), jnp.float32),
        grid_spec=pltpu.PrefetchScalarGridSpec(
            num_scalar_prefetch=0,
            grid=(B, n_h),
            in_specs=in_specs,
            out_specs=out_spec),
        compiler_params=pltpu.CompilerParams(
            dimension_semantics=("parallel", "arbitrary"),
            vmem_limit_bytes=vmem_limit),
        cost_estimate=cost,
    )(*inputs)
    return _finalize(partials, eps)


# --------------------------------------------------------------------------
# Public wrapper (matches the PyTorch DiceLoss.forward semantics).
# --------------------------------------------------------------------------
def dice_loss(pred, gt, mask, weights=None, eps=1e-6, *,
              lane_width=None, row_tile=None, num_splits=None):
    """loss = 1 - 2*sum(p*g*m) / (sum(p*m) + sum(g*m) + eps).

    For 4-D pred/gt only channel 0 is used (selected by the BlockSpec, not by
    an HBM slice copy). Inputs stream in their original dtype (bf16/int8/...)
    and are upcast to f32 inside VMEM — do not pre-cast to f32.
    """
    if pred.ndim == 4 and pred.shape[1] == 1:  # C==1: free reshape, use flat path
        pred = pred.reshape(pred.shape[0], *pred.shape[2:])
        gt = gt.reshape(gt.shape[0], *gt.shape[2:])
    four_d = pred.ndim == 4
    if four_d:
        assert gt.shape == pred.shape
        sliced_shape = (pred.shape[0],) + pred.shape[2:]
    else:
        assert pred.shape == gt.shape
        sliced_shape = pred.shape
    assert sliced_shape == mask.shape
    if weights is not None:
        assert weights.shape == mask.shape

    d_row_tile, d_splits, vmem_limit = _chip_defaults()
    if row_tile is None:
        row_tile = d_row_tile
    if num_splits is None:
        num_splits = d_splits

    def _sanitize(x):  # bool refs are awkward on TPU; int8 keeps traffic minimal
        return x.astype(jnp.int8) if jnp.issubdtype(x.dtype, jnp.bool_) else x
    pred, gt, mask = _sanitize(pred), _sanitize(gt), _sanitize(mask)
    if weights is not None:
        weights = _sanitize(weights)

    n = mask.size
    lane = None
    if not four_d:
        candidates = (lane_width,) if lane_width is not None else (512, 256, 128)
        for c in candidates:
            if c and c % 128 == 0 and n % c == 0:
                lane = c
                break

    if lane is not None:
        return _dice_flat(pred, gt, mask, weights, eps, lane, row_tile,
                          num_splits, vmem_limit)
    return _dice_native(pred, gt, mask, weights, eps, four_d, row_tile,
                        vmem_limit)


# --------------------------------------------------------------------------
# Pure-JAX reference (mirrors the PyTorch module).
# --------------------------------------------------------------------------
def _dice_loss_ref(pred, gt, mask, weights=None, eps=1e-6):
    if pred.ndim == 4:
        pred = pred[:, 0, :, :]
        gt = gt[:, 0, :, :]
    pred = pred.astype(jnp.float32)
    gt = gt.astype(jnp.float32)
    mask = mask.astype(jnp.float32)
    if weights is not None:
        mask = weights.astype(jnp.float32) * mask
    intersection = jnp.sum(pred * gt * mask)
    union = jnp.sum(pred * mask) + jnp.sum(gt * mask) + eps
    return 1.0 - 2.0 * intersection / union


if __name__ == "__main__":
    key = jax.random.PRNGKey(0)
    k1, k2, k3, k4, k5, k6, k7, k8 = jax.random.split(key, 8)

    # --- 4-D path: channel-0 via strided BlockSpec (no HBM slice copy) ---
    B, C, H, W = 2, 4, 16, 16
    pred = jax.nn.sigmoid(jax.random.normal(k1, (B, C, H, W), jnp.float32))
    gt = (jax.random.uniform(k2, (B, C, H, W)) > 0.5).astype(jnp.float32)
    mask = (jax.random.uniform(k3, (B, H, W)) > 0.2).astype(jnp.float32)
    weights = jax.random.uniform(k4, (B, H, W), jnp.float32) + 0.5

    loss = dice_loss(pred, gt, mask, weights)
    jax.block_until_ready(loss)
    ref = _dice_loss_ref(pred, gt, mask, weights)
    assert jnp.allclose(loss, ref, atol=1e-5, rtol=1e-5), (loss, ref)
    assert float(loss) <= 1.0

    loss_nw = dice_loss(pred, gt, mask)  # weights=None: 3-stream kernel variant
    jax.block_until_ready(loss_nw)
    ref_nw = _dice_loss_ref(pred, gt, mask)
    assert jnp.allclose(loss_nw, ref_nw, atol=1e-5, rtol=1e-5), (loss_nw, ref_nw)

    # --- flat lane-dense path with narrow dtypes (bf16 / int8, no pre-cast) ---
    B3, H3, W3 = 2, 16, 64  # n = 2048 -> lane = 512, free reshape
    pred3 = jax.nn.sigmoid(jax.random.normal(k5, (B3, H3, W3))).astype(jnp.bfloat16)
    gt3 = (jax.random.uniform(k6, (B3, H3, W3)) > 0.5).astype(jnp.int8)
    mask3 = (jax.random.uniform(k7, (B3, H3, W3)) > 0.3).astype(jnp.int8)
    loss3 = dice_loss(pred3, gt3, mask3)
    jax.block_until_ready(loss3)
    ref3 = _dice_loss_ref(pred3, gt3, mask3)
    assert jnp.allclose(loss3, ref3, atol=1e-5, rtol=1e-5), (loss3, ref3)

    # --- flat path: ragged row blocks + duplicate-clamped multi-split ---
    B4, H4, W4 = 3, 20, 64  # n = 3840 -> lane = 128 (forced)
    pred4 = jax.nn.sigmoid(jax.random.normal(k8, (B4, H4, W4), jnp.float32))
    gt4 = (jax.random.uniform(k2, (B4, H4, W4)) > 0.5).astype(jnp.float32)
    mask4 = (jax.random.uniform(k3, (B4, H4, W4)) > 0.3).astype(jnp.float32)
    w4 = jax.random.uniform(k4, (B4, H4, W4), jnp.float32) + 0.5
    loss4 = dice_loss(pred4, gt4, mask4, w4,
                      lane_width=128, row_tile=8, num_splits=3)
    jax.block_until_ready(loss4)
    ref4 = _dice_loss_ref(pred4, gt4, mask4, w4)
    assert jnp.allclose(loss4, ref4, atol=1e-5, rtol=1e-5), (loss4, ref4)

    # --- native 3-D path (n % 128 != 0, so no free flat reshape), ragged H ---
    B5, H5, W5 = 2, 50, 24  # n = 2400
    pred5 = jax.nn.sigmoid(jax.random.normal(k6, (B5, H5, W5), jnp.float32))
    gt5 = (jax.random.uniform(k7, (B5, H5, W5)) > 0.5).astype(jnp.float32)
    mask5 = (jax.random.uniform(k8, (B5, H5, W5)) > 0.3).astype(jnp.float32)
    loss5 = dice_loss(pred5, gt5, mask5, row_tile=2)  # forces th=8 < H (mask path)
    jax.block_until_ready(loss5)
    ref5 = _dice_loss_ref(pred5, gt5, mask5)
    assert jnp.allclose(loss5, ref5, atol=1e-5, rtol=1e-5), (loss5, ref5)

    print("KERNEL_OK")
</pallas_src>

<mosaic_0001>
module attributes {stable_mosaic.version = 11 : i64} {
  func.func @_dice_kernel(%arg0: i32, %arg1: i32, %arg2: memref<1x1x16x16xf32, #tpu.memory_space<vmem>>, %arg3: memref<1x1x16x16xf32, #tpu.memory_space<vmem>>, %arg4: memref<1x16x16xf32, #tpu.memory_space<vmem>>, %arg5: memref<1x16x16xf32, #tpu.memory_space<vmem>>, %arg6: memref<24x16xf32, #tpu.memory_space<vmem>>) attributes {dimension_semantics = [#tpu.dimension_semantics<parallel>, #tpu.dimension_semantics<arbitrary>], iteration_bounds = array<i64: 2, 1>, scalar_prefetch = 0 : i64, scratch_operands = 0 : i64, tpu.core_type = #tpu.core_type<tc>, window_params = [{transform_indices = @transform_0, window_bounds = array<i64: 1, 1, 16, 16>}, {transform_indices = @transform_1, window_bounds = array<i64: 1, 1, 16, 16>}, {transform_indices = @transform_2, window_bounds = array<i64: 1, 16, 16>}, {transform_indices = @transform_3, window_bounds = array<i64: 1, 16, 16>}, {transform_indices = @transform_4, window_bounds = array<i64: 24, 16>}]} {
    %c0_i32 = arith.constant 0 : i32
    %0 = arith.cmpi eq, %arg1, %c0_i32 : i32
    %1 = arith.extui %0 : i1 to i32
    %c0_i32_0 = arith.constant 0 : i32
    %2 = arith.cmpi ne, %1, %c0_i32_0 : i32
    scf.if %2 {
      %cst_26 = arith.constant 0.000000e+00 : f32
      %30 = vector.broadcast %cst_26 : f32 to vector<24x16xf32>
      %c0_27 = arith.constant 0 : index
      %c0_28 = arith.constant 0 : index
      %31 = vector.load %arg6[%c0_27, %c0_28] : memref<24x16xf32, #tpu.memory_space<vmem>>, vector<24x16xf32>
      tpu.vector_store %arg6[%c0_27, %c0_28], %30 {strides = array<i32>} : memref<24x16xf32, #tpu.memory_space<vmem>>, vector<24x16xf32>,
    } else {
    }
    %c0 = arith.constant 0 : index
    %c0_1 = arith.constant 0 : index
    %c0_2 = arith.constant 0 : index
    %c0_3 = arith.constant 0 : index
    %3 = vector.load %arg2[%c0, %c0_1, %c0_2, %c0_3] : memref<1x1x16x16xf32, #tpu.memory_space<vmem>>, vector<1x1x16x16xf32>
    %4 = vector.shape_cast %3 : vector<1x1x16x16xf32> to vector<16x16xf32>
    %c0_4 = arith.constant 0 : index
    %c0_5 = arith.constant 0 : index
    %c0_6 = arith.constant 0 : index
    %c0_7 = arith.constant 0 : index
    %5 = vector.load %arg3[%c0_4, %c0_5, %c0_6, %c0_7] : memref<1x1x16x16xf32, #tpu.memory_space<vmem>>, vector<1x1x16x16xf32>
    %6 = vector.shape_cast %5 : vector<1x1x16x16xf32> to vector<16x16xf32>
    %c0_8 = arith.constant 0 : index
    %c0_9 = arith.constant 0 : index
    %c0_10 = arith.constant 0 : index
    %7 = vector.load %arg4[%c0_8, %c0_9, %c0_10] : memref<1x16x16xf32, #tpu.memory_space<vmem>>, vector<1x16x16xf32>
    %8 = vector.shape_cast %7 : vector<1x16x16xf32> to vector<16x16xf32>
    %c0_11 = arith.constant 0 : index
    %c0_12 = arith.constant 0 : index
    %c0_13 = arith.constant 0 : index
    %9 = vector.load %arg5[%c0_11, %c0_12, %c0_13] : memref<1x16x16xf32, #tpu.memory_space<vmem>>, vector<1x16x16xf32>
    %10 = vector.shape_cast %9 : vector<1x16x16xf32> to vector<16x16xf32>
    %11 = arith.mulf %8, %10 : vector<16x16xf32>
    %12 = arith.mulf %4, %11 : vector<16x16xf32>
    %13 = arith.mulf %6, %11 : vector<16x16xf32>
    %14 = arith.mulf %12, %6 : vector<16x16xf32>
    %15 = vector.shape_cast %14 : vector<16x16xf32> to vector<2x8x16xf32>
    %cst = arith.constant dense<0.000000e+00> : vector<8x16xf32>
    %16 = vector.multi_reduction <add>, %15, %cst [0] : vector<2x8x16xf32> to vector<8x16xf32>
    %c0_14 = arith.constant 0 : index
    %c0_15 = arith.constant 0 : index
    %17 = vector.load %arg6[%c0_14, %c0_15] : memref<24x16xf32, #tpu.memory_space<vmem>>, vector<8x16xf32>
    %18 = arith.addf %17, %16 : vector<8x16xf32>
    %c0_16 = arith.constant 0 : index
    %c0_17 = arith.constant 0 : index
    %19 = vector.load %arg6[%c0_16, %c0_17] : memref<24x16xf32, #tpu.memory_space<vmem>>, vector<8x16xf32>
    tpu.vector_store %arg6[%c0_16, %c0_17], %18 {strides = array<i32>} : memref<24x16xf32, #tpu.memory_space<vmem>>, vector<8x16xf32>,
    %20 = vector.shape_cast %12 : vector<16x16xf32> to vector<2x8x16xf32>
    %cst_18 = arith.constant dense<0.000000e+00> : vector<8x16xf32>
    %21 = vector.multi_reduction <add>, %20, %cst_18 [0] : vector<2x8x16xf32> to vector<8x16xf32>
    %c8 = arith.constant 8 : index
    %c0_19 = arith.constant 0 : index
    %22 = vector.load %arg6[%c8, %c0_19] : memref<24x16xf32, #tpu.memory_space<vmem>>, vector<8x16xf32>
    %23 = arith.addf %22, %21 : vector<8x16xf32>
    %c8_20 = arith.constant 8 : index
    %c0_21 = arith.constant 0 : index
    %24 = vector.load %arg6[%c8_20, %c0_21] : memref<24x16xf32, #tpu.memory_space<vmem>>, vector<8x16xf32>
    tpu.vector_store %arg6[%c8_20, %c0_21], %23 {strides = array<i32>} : memref<24x16xf32, #tpu.memory_space<vmem>>, vector<8x16xf32>,
    %25 = vector.shape_cast %13 : vector<16x16xf32> to vector<2x8x16xf32>
    %cst_22 = arith.constant dense<0.000000e+00> : vector<8x16xf32>
    %26 = vector.multi_reduction <add>, %25, %cst_22 [0] : vector<2x8x16xf32> to vector<8x16xf32>
    %c16 = arith.constant 16 : index
    %c0_23 = arith.constant 0 : index
    %27 = vector.load %arg6[%c16, %c0_23] : memref<24x16xf32, #tpu.memory_space<vmem>>, vector<8x16xf32>
    %28 = arith.addf %27, %26 : vector<8x16xf32>
    %c16_24 = arith.constant 16 : index
    %c0_25 = arith.constant 0 : index
    %29 = vector.load %arg6[%c16_24, %c0_25] : memref<24x16xf32, #tpu.memory_space<vmem>>, vector<8x16xf32>
    tpu.vector_store %arg6[%c16_24, %c0_25], %28 {strides = array<i32>} : memref<24x16xf32, #tpu.memory_space<vmem>>, vector<8x16xf32>,
    return
  }
  func.func @transform_0(%arg0: i32, %arg1: i32) -> (i32, i32, i32, i32) {
    %c0_i32 = arith.constant 0 : i32
    %c0_i32_0 = arith.constant 0 : i32
    %c0_i32_1 = arith.constant 0 : i32
    return %arg0, %c0_i32, %arg1, %c0_i32_0 : i32, i32, i32, i32
  }
  func.func @transform_1(%arg0: i32, %arg1: i32) -> (i32, i32, i32, i32) {
    %c0_i32 = arith.constant 0 : i32
    %c0_i32_0 = arith.constant 0 : i32
    %c0_i32_1 = arith.constant 0 : i32
    return %arg0, %c0_i32, %arg1, %c0_i32_0 : i32, i32, i32, i32
  }
  func.func @transform_2(%arg0: i32, %arg1: i32) -> (i32, i32, i32) {
    %c0_i32 = arith.constant 0 : i32
    %c0_i32_0 = arith.constant 0 : i32
    return %arg0, %arg1, %c0_i32 : i32, i32, i32
  }
  func.func @transform_3(%arg0: i32, %arg1: i32) -> (i32, i32, i32) {
    %c0_i32 = arith.constant 0 : i32
    %c0_i32_0 = arith.constant 0 : i32
    return %arg0, %arg1, %c0_i32 : i32, i32, i32
  }
  func.func @transform_4(%arg0: i32, %arg1: i32) -> (i32, i32) {
    %c0_i32 = arith.constant 0 : i32
    %c0_i32_0 = arith.constant 0 : i32
    return %arg0, %c0_i32 : i32, i32
  }
}

</mosaic_0001>

<llo_original>
// kernel: tpu_custom_call.1
$region0: #{tpu_custom_call.1}
  #allocation0 [shape = 'u32[]', space=smem, size = 0x4, offset = 0x4, fixed_abs, tag = 'smem constant byte address 0x4 - core index']
  #allocation1 [shape = 'u32[144,128]{1,0:T(1,128)}', space=vmem, size = 0x12000, scoped, tag = 'internal scratch']
  %s0 = inlined_call_operand.hbm [shape: f32[2,4,16,16], index: 0, kind: input, shape index: {}]
  %s1 = inlined_call_operand.hbm [shape: f32[2,4,16,16], index: 1, kind: input, shape index: {}]
  %s2 = inlined_call_operand.hbm [shape: f32[2,16,16], index: 2, kind: input, shape index: {}]
  %s3 = inlined_call_operand.hbm [shape: f32[2,16,16], index: 3, kind: input, shape index: {}]
  %s4 = inlined_call_operand.vmem [shape: f32[48,16], index: 4, kind: output, shape index: {}]
  %s5 = sld [smem:[#allocation0]]
  $region69: #{tpu_custom_call.1} parent=0
    _
  %s7 = ssub.s32 1, %s5
  %s8 = scalar_select 0, %s7, %s5
  $region1: #{tpu_custom_call.1} parent=0
    #allocation2 [shape = 'u8[16384]{0}', space=vmem, size = 0x4000, scoped, tag = 'input window, operand 0']
    #allocation3 [shape = 's32[2]{0}', space=sflag, size = 0x8, scoped, tag = 'scoped memory for tpu_custom_call.1']
    #allocation4 [shape = 'u8[16384]{0}', space=vmem, size = 0x4000, scoped, tag = 'input window, operand 1']
    #allocation5 [shape = 's32[2]{0}', space=sflag, size = 0x8, scoped, tag = 'scoped memory for tpu_custom_call.1']
    #allocation6 [shape = 'u8[16384]{0}', space=vmem, size = 0x4000, scoped, tag = 'input window, operand 2']
    #allocation7 [shape = 'u8[16384]{0}', space=vmem, size = 0x4000, scoped, tag = 'input window, operand 3']
    #allocation8 [shape = 's32[2]{0}', space=sflag, size = 0x8, scoped, tag = 'scoped memory for tpu_custom_call.1']
    %9 = vsyncpa [#allocation3], 0
    %s10 = scalar_lea.sflag [#allocation3], 1
    %11 = vsyncpa %s10, 0
    %12 = vsyncpa [#allocation5], 0
    %s13 = scalar_lea.sflag [#allocation5], 1
    %14 = vsyncpa %s13, 0
    %15 = vsyncpa [#allocation8], 0
    %s16 = scalar_lea.sflag [#allocation8], 1
    %17 = vsyncpa %s16, 0
    loop: start=0, step=1, limit=4
    $region2: #{tpu_custom_call.1} parent=1 // loop_pre_header
      _
    $region3: #{tpu_custom_call.1} parent=1 // loop_header
      %s19 = sphi 0, %s23
      %p20 = scmp.ge.s32.totalorder %s19, 4
      %s26 = sphi 0, %s38
      %s27 = sphi 0, %s34
      %s28 = sphi 0, %s26
      %s29 = sphi 0, %s27
      %s30 = sphi 0, %s28
      %s31 = sphi 0, %s29
      %s43 = sphi 0, %s45
      %s46 = sphi 0, %s43
      %s47 = sphi 0, %s46
      %s63 = sphi 0, %s47
      %s71 = sphi 0, %s73
      %s74 = sphi 0, %s71
      %s75 = sphi 0, %s74
      %s91 = sphi 0, %s75
      %s99 = sphi 0, %s101
      %s102 = sphi 0, %s99
      %s103 = sphi 0, %s102
      %s119 = sphi 0, %s103
      %s127 = sphi 0, %s129
      %s130 = sphi 0, %s127
      %s131 = sphi 0, %s130
      %s147 = sphi 0, %s131
      %s153 = sphi 0, %s155
      %s156 = sphi 0, %s153
      %s157 = sphi 0, %s156
      %s173 = sphi 0, %s157
    $region4: #{tpu_custom_call.1} parent=1 // loop_header_branch
      %22 = sbr.rel (%p20) target = $region8
    $region5: #{tpu_custom_call.1} parent=1 // loop_body
      %s24 = ssub.s32 %s19, 1
      %s25 = ssub.s32 %s19, 2
      %s32 = sadd.s32 1, %s27
      %p33 = scmp.ge.s32.totalorder %s32, 1
      %s34 = scalar_select %p33, 0, %s32
      %s35 = sadd.s32 1, %s26
      %s36 = scalar_select %p33, %s35, %s26
      %p37 = scmp.ge.s32.totalorder %s36, 2
      %s38 = scalar_select %p37, 0, %s36
      %s39 = ssub.s32 %s26, %s38
      %s40 = ssub.s32 %s27, %s34
      %s41 = sor.u32 %s39, %s40
      %p42 = scmp.eq.s32.totalorder %s41, 0
      %s44 = sadd.s32 %s43, 1
      %s45 = scalar_select %p42, %s43, %s44
      %p48 = pneg %p42
      %p49 = scmp.eq.s32.totalorder %s19, 1
      %p50 = por %p48, %p49
      %p51 = scmp.ne.s32.totalorder %s43, %s46
      %p52 = scmp.eq.s32.totalorder %s19, 0
      %p53 = por %p51, %p52
      %p54 = scmp.ne.s32.totalorder %s43, %s46
      %p55 = scmp.eq.s32.totalorder %s24, 1
      %p56 = por %p54, %p55
      %p57 = scmp.ne.s32.totalorder %s46, %s47
      %p58 = scmp.eq.s32.totalorder %s24, 0
      %p59 = por %p57, %p58
      %p60 = scmp.ne.s32.totalorder %s46, %s47
      %p61 = scmp.eq.s32.totalorder %s25, 1
      %p62 = por %p60, %p61
      %p64 = scmp.ne.s32.totalorder %s47, %s63
      %p65 = scmp.eq.s32.totalorder %s25, 0
      %p66 = por %p64, %p65
      %s67 = ssub.s32 %s26, %s38
      %s68 = ssub.s32 %s27, %s34
      %s69 = sor.u32 %s67, %s68
      %p70 = scmp.eq.s32.totalorder %s69, 0
      %s72 = sadd.s32 %s71, 1
      %s73 = scalar_select %p70, %s71, %s72
      %p76 = pneg %p70
      %p77 = scmp.eq.s32.totalorder %s19, 1
      %p78 = por %p76, %p77
      %p79 = scmp.ne.s32.totalorder %s71, %s74
      %p80 = scmp.eq.s32.totalorder %s19, 0
      %p81 = por %p79, %p80
      %p82 = scmp.ne.s32.totalorder %s71, %s74
      %p83 = scmp.eq.s32.totalorder %s24, 1
      %p84 = por %p82, %p83
      %p85 = scmp.ne.s32.totalorder %s74, %s75
      %p86 = scmp.eq.s32.totalorder %s24, 0
      %p87 = por %p85, %p86
      %p88 = scmp.ne.s32.totalorder %s74, %s75
      %p89 = scmp.eq.s32.totalorder %s25, 1
      %p90 = por %p88, %p89
      %p92 = scmp.ne.s32.totalorder %s75, %s91
      %p93 = scmp.eq.s32.totalorder %s25, 0
      %p94 = por %p92, %p93
      %s95 = ssub.s32 %s26, %s38
      %s96 = ssub.s32 %s27, %s34
      %s97 = sor.u32 %s95, %s96
      %p98 = scmp.eq.s32.totalorder %s97, 0
      %s100 = sadd.s32 %s99, 1
      %s101 = scalar_select %p98, %s99, %s100
      %p104 = pneg %p98
      %p105 = scmp.eq.s32.totalorder %s19, 1
      %p106 = por %p104, %p105
      %p107 = scmp.ne.s32.totalorder %s99, %s102
      %p108 = scmp.eq.s32.totalorder %s19, 0
      %p109 = por %p107, %p108
      %p110 = scmp.ne.s32.totalorder %s99, %s102
      %p111 = scmp.eq.s32.totalorder %s24, 1
      %p112 = por %p110, %p111
      %p113 = scmp.ne.s32.totalorder %s102, %s103
      %p114 = scmp.eq.s32.totalorder %s24, 0
      %p115 = por %p113, %p114
      %p116 = scmp.ne.s32.totalorder %s102, %s103
      %p117 = scmp.eq.s32.totalorder %s25, 1
      %p118 = por %p116, %p117
      %p120 = scmp.ne.s32.totalorder %s103, %s119
      %p121 = scmp.eq.s32.totalorder %s25, 0
      %p122 = por %p120, %p121
      %s123 = ssub.s32 %s26, %s38
      %s124 = ssub.s32 %s27, %s34
      %s125 = sor.u32 %s123, %s124
      %p126 = scmp.eq.s32.totalorder %s125, 0
      %s128 = sadd.s32 %s127, 1
      %s129 = scalar_select %p126, %s127, %s128
      %p132 = pneg %p126
      %p133 = scmp.eq.s32.totalorder %s19, 1
      %p134 = por %p132, %p133
      %p135 = scmp.ne.s32.totalorder %s127, %s130
      %p136 = scmp.eq.s32.totalorder %s19, 0
      %p137 = por %p135, %p136
      %p138 = scmp.ne.s32.totalorder %s127, %s130
      %p139 = scmp.eq.s32.totalorder %s24, 1
      %p140 = por %p138, %p139
      %p141 = scmp.ne.s32.totalorder %s130, %s131
      %p142 = scmp.eq.s32.totalorder %s24, 0
      %p143 = por %p141, %p142
      %p144 = scmp.ne.s32.totalorder %s130, %s131
      %p145 = scmp.eq.s32.totalorder %s25, 1
      %p146 = por %p144, %p145
      %p148 = scmp.ne.s32.totalorder %s131, %s147
      %p149 = scmp.eq.s32.totalorder %s25, 0
      %p150 = por %p148, %p149
      %s151 = ssub.s32 %s26, %s38
      %p152 = scmp.eq.s32.totalorder %s151, 0
      %s154 = sadd.s32 %s153, 1
      %s155 = scalar_select %p152, %s153, %s154
      %p158 = pneg %p152
      %p159 = scmp.eq.s32.totalorder %s19, 1
      %p160 = por %p158, %p159
      %p161 = scmp.ne.s32.totalorder %s153, %s156
      %p162 = scmp.eq.s32.totalorder %s19, 0
      %p163 = por %p161, %p162
      %p164 = scmp.ne.s32.totalorder %s153, %s156
      %p165 = scmp.eq.s32.totalorder %s24, 1
      %p166 = por %p164, %p165
      %p167 = scmp.ne.s32.totalorder %s156, %s157
      %p168 = scmp.eq.s32.totalorder %s24, 0
      %p169 = por %p167, %p168
      %p170 = scmp.ne.s32.totalorder %s156, %s157
      %p171 = scmp.eq.s32.totalorder %s25, 1
      %p172 = por %p170, %p171
      %p174 = scmp.ne.s32.totalorder %s157, %s173
      %p175 = scmp.eq.s32.totalorder %s25, 0
      %p176 = por %p174, %p175
      %p177 = scmp.le.s32.totalorder 1, %s19
      %p178 = scmp.lt.s32.totalorder %s19, 3
      %p179 = pnand %p177, %p178
      %p180 = pneg %p179
      // Predicated region
      $region9: #{tpu_custom_call.1} parent=5 // pred_check
        _
      $region10: #{tpu_custom_call.1} parent=5 // pred_check_branch
        %182 = sbr.rel (%p179) target = $region12
      $region11: #{tpu_custom_call.1} parent=5 // pred_region
        %s183 = ssub.s32 %s19, 1
      $region12: #{tpu_custom_call.1} parent=5 // pred_fallthru
        _
      %p184 = scmp.lt.s32.totalorder %s19, 2
      // Predicated region
      $region13: #{tpu_custom_call.1} parent=5 // pred_check
        %p185 = pneg %p184
      $region14: #{tpu_custom_call.1} parent=5 // pred_check_branch
        %187 = sbr.rel (%p185) target = $region16
      $region15: #{tpu_custom_call.1} parent=5 // pred_region
        // Predicated region
        $region17: #{tpu_custom_call.1} parent=15 // pred_check
          %p188 = pneg %p53
        $region18: #{tpu_custom_call.1} parent=15 // pred_check_branch
          %190 = sbr.rel (%p188) target = $region20
        $region19: #{tpu_custom_call.1} parent=15 // pred_region
          %s191 = sand.u32 %s43, 1
          %s192 = scalar_lea.sflag [#allocation3], %s191
          %s193 = sand.u32 %s43, 1
          %s194 = smul.addr %s193, 16
          %s195 = scalar_lea.vmem [#allocation2], %s194
          %s196 = smul.u32 2, %s27
          %s198 = ssub.s32 256, 256
          %199 = vsyncadd %s192, %s198
          %s200 = smul.addr %s26, 8
          %s201 = sadd.s32 %s196, %s200
          %s202 = smul.addr %s201, 128
          %s203 = scalar_lea.hbm %s0, %s202
          %s204 = sshll.u32 %s195, 4
          %s205 = int_to_ptr.vmem [resolvable:$true] %s204
          %210 = dma.hbm_to_vmem [thread:$0]  %s203, 256, %s205, %s192, 128, 128, 8
        $region20: #{tpu_custom_call.1} parent=15 // pred_fallthru
          _
        // Predicated region
        $region21: #{tpu_custom_call.1} parent=15 // pred_check
          %p211 = pneg %p81
        $region22: #{tpu_custom_call.1} parent=15 // pred_check_branch
          %213 = sbr.rel (%p211) target = $region24
        $region23: #{tpu_custom_call.1} parent=15 // pred_region
          %s214 = sand.u32 %s19, 1
          %s215 = scalar_lea.sflag [#allocation5], %s214
          %s216 = sand.u32 %s71, 1
          %s217 = smul.addr %s216, 16
          %s218 = scalar_lea.vmem [#allocation4], %s217
          %s219 = smul.u32 2, %s27
          %s221 = ssub.s32 256, 256
          %222 = vsyncadd %s215, %s221
          %s223 = smul.addr %s26, 8
          %s224 = sadd.s32 %s219, %s223
          %s225 = smul.addr %s224, 128
          %s226 = scalar_lea.hbm %s1, %s225
          %s227 = sshll.u32 %s218, 4
          %s228 = int_to_ptr.vmem [resolvable:$true] %s227
          %233 = dma.hbm_to_vmem [thread:$0]  %s226, 256, %s228, %s215, 128, 128, 8
        $region24: #{tpu_custom_call.1} parent=15 // pred_fallthru
          _
        // Predicated region
        $region25: #{tpu_custom_call.1} parent=15 // pred_check
          %p234 = pneg %p109
        $region26: #{tpu_custom_call.1} parent=15 // pred_check_branch
          %236 = sbr.rel (%p234) target = $region28
        $region27: #{tpu_custom_call.1} parent=15 // pred_region
          %s237 = sand.u32 %s19, 1
          %s238 = scalar_lea.sflag [#allocation5], %s237
          %s239 = sand.u32 %s99, 1
          %s240 = smul.addr %s239, 16
          %s241 = scalar_lea.vmem [#allocation6], %s240
          %s242 = smul.u32 2, %s27
          %s244 = ssub.s32 256, 256
          %245 = vsyncadd %s238, %s244
          %s246 = smul.addr %s26, 2
          %s247 = sadd.s32 %s242, %s246
          %s248 = smul.addr %s247, 128
          %s249 = scalar_lea.hbm %s2, %s248
          %s250 = sshll.u32 %s241, 4
          %s251 = int_to_ptr.vmem [resolvable:$true] %s250
          %256 = dma.hbm_to_vmem [thread:$0]  %s249, 256, %s251, %s238, 128, 128, 8
        $region28: #{tpu_custom_call.1} parent=15 // pred_fallthru
          _
        // Predicated region
        $region29: #{tpu_custom_call.1} parent=15 // pred_check
          %p257 = pneg %p137
        $region30: #{tpu_custom_call.1} parent=15 // pred_check_branch
          %259 = sbr.rel (%p257) target = $region32
        $region31: #{tpu_custom_call.1} parent=15 // pred_region
          %s260 = sand.u32 %s127, 1
          %s261 = scalar_lea.sflag [#allocation8], %s260
          %s262 = sand.u32 %s127, 1
          %s263 = smul.addr %s262, 16
          %s264 = scalar_lea.vmem [#allocation7], %s263
          %s265 = smul.u32 2, %s27
          %s267 = ssub.s32 256, 256
          %268 = vsyncadd %s261, %s267
          %s269 = smul.addr %s26, 2
          %s270 = sadd.s32 %s265, %s269
          %s271 = smul.addr %s270, 128
          %s272 = scalar_lea.hbm %s3, %s271
          %s273 = sshll.u32 %s264, 4
          %s274 = int_to_ptr.vmem [resolvable:$true] %s273
          %279 = dma.hbm_to_vmem [thread:$0]  %s272, 256, %s274, %s261, 128, 128, 8
        $region32: #{tpu_custom_call.1} parent=15 // pred_fallthru
          _
      $region16: #{tpu_custom_call.1} parent=5 // pred_fallthru
        _
      %p280 = scmp.le.s32.totalorder 1, %s19
      %p281 = scmp.lt.s32.totalorder %s19, 3
      %p282 = pnand %p280, %p281
      %p283 = pneg %p282
      // Predicated region
      $region33: #{tpu_custom_call.1} parent=5 // pred_check
        _
      $region34: #{tpu_custom_call.1} parent=5 // pred_check_branch
        %285 = sbr.rel (%p282) target = $region36
      $region35: #{tpu_custom_call.1} parent=5 // pred_region
        %s286 = ssub.s32 %s19, 1
        %s287 = sand.u32 %s46, 1
        %s288 = scalar_lea.sflag [#allocation3], %s287
        %s289 = sand.u32 %s46, 1
        %s290 = smul.addr %s289, 16
        %s291 = scalar_lea.vmem [#allocation2], %s290
        // Predicated region
        $region37: #{tpu_custom_call.1} parent=35 // pred_check
          %p292 = pneg %p59
        $region38: #{tpu_custom_call.1} parent=35 // pred_check_branch
          %294 = sbr.rel (%p292) target = $region40
        $region39: #{tpu_custom_call.1} parent=35 // pred_region
          %295 = dma.done %s288, 256
        $region40: #{tpu_custom_call.1} parent=35 // pred_fallthru
          _
        %s296 = sand.u32 %s24, 1
        %s297 = scalar_lea.sflag [#allocation5], %s296
        %s298 = sand.u32 %s74, 1
        %s299 = smul.addr %s298, 16
        %s300 = scalar_lea.vmem [#allocation4], %s299
        // Predicated region
        $region41: #{tpu_custom_call.1} parent=35 // pred_check
          %p301 = pneg %p87
        $region42: #{tpu_custom_call.1} parent=35 // pred_check_branch
          %303 = sbr.rel (%p301) target = $region44
        $region43: #{tpu_custom_call.1} parent=35 // pred_region
          %304 = dma.done %s297, 256
        $region44: #{tpu_custom_call.1} parent=35 // pred_fallthru
          _
        %s305 = sand.u32 %s24, 1
        %s306 = scalar_lea.sflag [#allocation5], %s305
        %s307 = sand.u32 %s102, 1
        %s308 = smul.addr %s307, 16
        %s309 = scalar_lea.vmem [#allocation6], %s308
        // Predicated region
        $region45: #{tpu_custom_call.1} parent=35 // pred_check
          %p310 = pneg %p115
        $region46: #{tpu_custom_call.1} parent=35 // pred_check_branch
          %312 = sbr.rel (%p310) target = $region48
        $region47: #{tpu_custom_call.1} parent=35 // pred_region
          %313 = dma.done %s306, 256
        $region48: #{tpu_custom_call.1} parent=35 // pred_fallthru
          _
        %s314 = sand.u32 %s130, 1
        %s315 = scalar_lea.sflag [#allocation8], %s314
        %s316 = sand.u32 %s130, 1
        %s317 = smul.addr %s316, 16
        %s318 = scalar_lea.vmem [#allocation7], %s317
        // Predicated region
        $region49: #{tpu_custom_call.1} parent=35 // pred_check
          %p319 = pneg %p143
        $region50: #{tpu_custom_call.1} parent=35 // pred_check_branch
          %321 = sbr.rel (%p319) target = $region52
        $region51: #{tpu_custom_call.1} parent=35 // pred_region
          %322 = dma.done %s315, 256
        $region52: #{tpu_custom_call.1} parent=35 // pred_fallthru
          _
        %s323 = sand.u32 %s46, 1
        %s324 = scalar_lea.sflag [#allocation3], %s323
        %s325 = sand.u32 %s46, 1
        %s326 = smul.addr %s325, 16
        %s327 = scalar_lea.vmem [#allocation2], %s326
        %p328 = pneg %p59
        %p329 = pneg %p56
        %s330 = sand.u32 %s24, 1
        %s331 = scalar_lea.sflag [#allocation5], %s330
        %s332 = sand.u32 %s74, 1
        %s333 = smul.addr %s332, 16
        %s334 = scalar_lea.vmem [#allocation4], %s333
        %p335 = pneg %p87
        %p336 = pneg %p84
        %s337 = sand.u32 %s24, 1
        %s338 = scalar_lea.sflag [#allocation5], %s337
        %s339 = sand.u32 %s102, 1
        %s340 = smul.addr %s339, 16
        %s341 = scalar_lea.vmem [#allocation6], %s340
        %p342 = pneg %p115
        %p343 = pneg %p112
        %s344 = sand.u32 %s130, 1
        %s345 = scalar_lea.sflag [#allocation8], %s344
        %s346 = sand.u32 %s130, 1
        %s347 = smul.addr %s346, 16
        %s348 = scalar_lea.vmem [#allocation7], %s347
        %p349 = pneg %p143
        %p350 = pneg %p140
        %p351 = pneg %p169
        %p352 = pneg %p166
        %s353 = smul.u32 3, %s28
        %p354 = scmp.lt.s32.totalorder %s353, 5
        %s355 = scalar_select %p354, %s353, 5
        %s356 = smul.addr %s355, 8
        %s357 = scalar_lea.vmem %s4, %s356
        %s358 = smul.u32 2, %s29
        %s359 = smul.u32 2, %s29
        %s360 = smul.u32 2, %s29
        %s361 = smul.u32 2, %s29
        %s362 = smul.u32 3, %s28
        %p363 = scmp.lt.s32.totalorder %s362, 5
        %s364 = scalar_select %p363, %s362, 5
        %s365 = smul.addr %s364, 8
        %s366 = scalar_lea.vmem %s4, %s365
        %s367 = smul.u32 3, %s28
        %p368 = scmp.eq.s32.totalorder %s29, 0
        // Predicated region
        $region53: #{tpu_custom_call.1} parent=35 // pred_check
          %p369 = pneg %p368
        $region54: #{tpu_custom_call.1} parent=35 // pred_check_branch
          %371 = sbr.rel (%p369) target = $region56
        $region55: #{tpu_custom_call.1} parent=35 // pred_region
          %vm372 = vcmask 130048
          %373 = vst.msk [vmem:[%s366] sm:$0xff] %vm372, 0.0
          %374 = vst.msk [vmem:[%s366 + $0x8] sm:$0xff] %vm372, 0.0
          %375 = vst.msk [vmem:[%s366 + $0x10] sm:$0xff] %vm372, 0.0
        $region56: #{tpu_custom_call.1} parent=35 // pred_fallthru
          _
        %v376 = vld [vmem:[%s291] sm:$0xff]
        %v377 = vld [vmem:[%s291 + $0x8] sm:$0xff]
        %v378 = vld [vmem:[%s300] sm:$0xff]
        %v379 = vld [vmem:[%s300 + $0x8] sm:$0xff]
        %v380 = vld [vmem:[%s309] sm:$0xff]
        %v381 = vld [vmem:[%s309 + $0x8] sm:$0xff]
        %v382 = vld [vmem:[%s318] sm:$0xff]
        %v383 = vld [vmem:[%s318 + $0x8] sm:$0xff]
        %v384 = vmul.f32 %v380, %v382
        %v385 = vmul.f32 %v381, %v383
        %v386 = vmul.f32 %v376, %v384
        %v387 = vmul.f32 %v377, %v385
        %v388 = vmul.f32 %v378, %v384
        %v389 = vmul.f32 %v379, %v385
        %v390 = vmul.f32 %v386, %v378
        %v391 = vmul.f32 %v387, %v379
        %vm392 = vcmask 130048
        %v393 = vsel %vm392, %v390, 0.0
        %v394 = vsel %vm392, %v391, 0.0
        %v395 = vadd.f32 %v393, %v394
        %v396 = vld [vmem:[%s366] sm:$0xff]
        %v397 = vadd.f32 %v396, %v395
        %398 = vst.msk [vmem:[%s366] sm:$0xff] %vm392, %v397
        %v399 = vsel %vm392, %v386, 0.0
        %v400 = vsel %vm392, %v387, 0.0
        %v401 = vadd.f32 %v399, %v400
        %v402 = vld [vmem:[%s366 + $0x8] sm:$0xff]
        %v403 = vadd.f32 %v402, %v401
        %404 = vst.msk [vmem:[%s366 + $0x8] sm:$0xff] %vm392, %v403
        %v405 = vsel %vm392, %v388, 0.0
        %v406 = vsel %vm392, %v389, 0.0
        %v407 = vadd.f32 %v405, %v406
        %v408 = vld [vmem:[%s366 + $0x10] sm:$0xff]
        %v409 = vadd.f32 %v408, %v407
        %410 = vst.msk [vmem:[%s366 + $0x10] sm:$0xff] %vm392, %v409
        %s411 = smul.u32 3, %s28
        %p412 = scmp.lt.s32.totalorder %s411, 5
        %s413 = scalar_select %p412, %s411, 5
        %s414 = smul.addr %s413, 8
        %s415 = scalar_lea.vmem %s4, %s414
        // Predicated region
        $region57: #{tpu_custom_call.1} parent=35 // pred_check
          %p416 = pneg %p166
        $region58: #{tpu_custom_call.1} parent=35 // pred_check_branch
          %418 = sbr.rel (%p416) target = $region60
        $region59: #{tpu_custom_call.1} parent=35 // pred_region
          %s419 = smul.u32 3, %s28
        $region60: #{tpu_custom_call.1} parent=35 // pred_fallthru
          _
      $region36: #{tpu_custom_call.1} parent=5 // pred_fallthru
        _
      %p420 = scmp.le.s32.totalorder 2, %s19
      // Predicated region
      $region61: #{tpu_custom_call.1} parent=5 // pred_check
        %p421 = pneg %p420
      $region62: #{tpu_custom_call.1} parent=5 // pred_check_branch
        %423 = sbr.rel (%p421) target = $region64
      $region63: #{tpu_custom_call.1} parent=5 // pred_region
        %s424 = ssub.s32 %s19, 2
        // Predicated region
        $region65: #{tpu_custom_call.1} parent=63 // pred_check
          %p425 = pneg %p172
        $region66: #{tpu_custom_call.1} parent=63 // pred_check_branch
          %427 = sbr.rel (%p425) target = $region68
        $region67: #{tpu_custom_call.1} parent=63 // pred_region
          %s428 = smul.u32 3, %s30
          %p429 = scmp.lt.s32.totalorder %s428, 5
          %s430 = scalar_select %p429, %s428, 5
          %s431 = smul.addr %s430, 8
          %s432 = scalar_lea.vmem %s4, %s431
        $region68: #{tpu_custom_call.1} parent=63 // pred_fallthru
          _
      $region64: #{tpu_custom_call.1} parent=5 // pred_fallthru
        _
    $region6: #{tpu_custom_call.1} parent=1 // loop_footer
      %s23 = sadd.s32 1, %s19
    $region7: #{tpu_custom_call.1} parent=1 // loop_footer_branch
      %18 = sbr.rel target = $region3
    $region8: #{tpu_custom_call.1} parent=1 // loop_exit
      _
    %433 = vsyncpa [#allocation3], 1
    %s434 = scalar_lea.sflag [#allocation3], 1
    %435 = vsyncpa %s434, 1
    %436 = vsyncpa [#allocation5], 1
    %s437 = scalar_lea.sflag [#allocation5], 1
    %438 = vsyncpa %s437, 1
    %439 = vsyncpa [#allocation8], 1
    %s440 = scalar_lea.sflag [#allocation8], 1
    %441 = vsyncpa %s440, 1

</llo_original>
